<compile_context>
chip_gen: v7x
topology: tpu7x:2x2x1
jax: 0.10.0
libtpu: 0.0.40
codegen_flags: <defaults>
</compile_context>

<pallas_src>
import functools

import jax
import jax.numpy as jnp
from jax.experimental import pallas as pl
from jax.experimental.pallas import tpu as pltpu

NUM_FEATURES = 16   # input_dim
HIDDEN_DIM   = 15   # fixed in the module
OUTPUT_DIM   = 1    # output_size (binary classification)
BN_EPS       = 1e-5

# Safe on every generation: v7x has 64 MiB VMEM/TC, v5e/v6e have 128 MiB.
_VMEM_LIMIT = 48 * 1024 * 1024

# dot_general dimension_numbers for "A @ B.T" (contract dim 1 of both operands).
_TRANS_B = (((1,), (1,)), ((), ()))


def _round_up(n, m):
    return ((n + m - 1) // m) * m


# --------------------------------------------------------------------------- #
# Fused single-call path (whole batch resident in VMEM).                       #
# --------------------------------------------------------------------------- #
def _fused_kernel(x_ref, w1_ref, gamma_ref, beta_ref, w2_ref, b2_ref, o_ref):
    # hw = W1 @ x^T  -> (H, B), lane-dense (batch on the 128-lane axis).
    hw = jax.lax.dot_general(w1_ref[...], x_ref[...], _TRANS_B,
                             preferred_element_type=jnp.float32)
    mean = jnp.mean(hw, axis=1, keepdims=True)                       # (H, 1)
    var = jnp.mean((hw - mean) ** 2, axis=1, keepdims=True)          # biased var
    scale = gamma_ref[...] * jax.lax.rsqrt(var + BN_EPS)             # (H, 1)
    shift = beta_ref[...] - mean * scale          # b1 cancels under batch-stats BN
    r = jnp.maximum(hw * scale + shift, 0.0)                         # (H, B)
    # Linear(15 -> 1) as VPU multiply + sublane reduce (no second MXU push).
    z = jnp.sum(r * w2_ref[...], axis=0, keepdims=True) + b2_ref[...]  # (1, B)
    o_ref[...] = 1.0 / (1.0 + jnp.exp(-z))                           # sigmoid


# --------------------------------------------------------------------------- #
# Two-pass path, pass 1: per-feature sum / sum-of-squares of hw = x @ W1^T.     #
# Grid = (2 cores, tiles_per_core); each core accumulates into its own slice.   #
# --------------------------------------------------------------------------- #
def _bn_stats_kernel(x_ref, w1_ref, sum_ref, sumsq_ref, *,
                     batch, tb, nt, tiles_per_core):
    core = pl.program_id(0)
    step = pl.program_id(1)
    gt = core * tiles_per_core + step            # global batch-tile index

    @pl.when(step == 0)
    def _():
        sum_ref[...] = jnp.zeros_like(sum_ref)
        sumsq_ref[...] = jnp.zeros_like(sumsq_ref)

    hw = jax.lax.dot_general(w1_ref[...], x_ref[...], _TRANS_B,
                             preferred_element_type=jnp.float32)     # (H, TB)

    # Interior tiles: every lane is a real batch row -> unmasked accumulate.
    @pl.when(gt < nt - 1)
    def _():
        sum_ref[...] += jnp.sum(hw, axis=1, keepdims=True)
        sumsq_ref[...] += jnp.sum(hw * hw, axis=1, keepdims=True)

    # Last real tile: mask lanes beyond the true batch (partial edge block).
    @pl.when(gt == nt - 1)
    def _():
        col = gt * tb + jax.lax.broadcasted_iota(jnp.int32, (1, tb), 1)
        hm = jnp.where(col < batch, hw, 0.0)
        sum_ref[...] += jnp.sum(hm, axis=1, keepdims=True)
        sumsq_ref[...] += jnp.sum(hm * hm, axis=1, keepdims=True)
    # gt > nt - 1 (clamped duplicate tile when nt is odd): contributes nothing.


# --------------------------------------------------------------------------- #
# Two-pass path, pass 2: folded BN + ReLU + Linear2 + sigmoid (fully parallel). #
# --------------------------------------------------------------------------- #
def _apply_kernel(x_ref, w1_ref, scale_ref, shift_ref, w2_ref, b2_ref, o_ref):
    hw = jax.lax.dot_general(w1_ref[...], x_ref[...], _TRANS_B,
                             preferred_element_type=jnp.float32)     # (H, TB)
    r = jnp.maximum(hw * scale_ref[...] + shift_ref[...], 0.0)       # BN + ReLU
    z = jnp.sum(r * w2_ref[...], axis=0, keepdims=True) + b2_ref[...]  # (1, TB)
    o_ref[...] = 1.0 / (1.0 + jnp.exp(-z))


def network_forward(x, w1, b1, gamma, beta, w2, b2, *,
                    max_tile=32768, fused_max_batch=32768):
    """x: (B, NUM_FEATURES) f32, torch-native params -> (B, OUTPUT_DIM) f32."""
    B, F = x.shape
    H, Fw = w1.shape
    O = w2.shape[0]
    assert F == Fw and O == 1, "kernel specialized for output_dim == 1"

    x = x.astype(jnp.float32)
    w1c = w1.astype(jnp.float32)                       # (H, F), torch-native
    gammac = gamma.reshape(H, 1).astype(jnp.float32)
    betac = beta.reshape(H, 1).astype(jnp.float32)
    w2c = w2.reshape(O, H).T.astype(jnp.float32)       # (H, 1)
    b2c = b2.reshape(O, 1).astype(jnp.float32)         # (1, 1)
    # b1 cancels exactly under training-mode BatchNorm statistics.
    del b1

    # ---------------- fused single-call fast path (small / medium B) ----------
    if B <= fused_max_batch:
        out_t = pl.pallas_call(
            _fused_kernel,
            out_shape=jax.ShapeDtypeStruct((O, B), jnp.float32),
            grid=(1,),
            in_specs=[
                pl.BlockSpec((B, F), lambda i: (0, 0)),   # x (whole batch)
                pl.BlockSpec((H, F), lambda i: (0, 0)),   # W1
                pl.BlockSpec((H, 1), lambda i: (0, 0)),   # gamma
                pl.BlockSpec((H, 1), lambda i: (0, 0)),   # beta
                pl.BlockSpec((H, 1), lambda i: (0, 0)),   # W2 column
                pl.BlockSpec((1, 1), lambda i: (0, 0)),   # b2
            ],
            out_specs=pl.BlockSpec((O, B), lambda i: (0, 0)),
            compiler_params=pltpu.CompilerParams(
                dimension_semantics=("arbitrary",),
                vmem_limit_bytes=_VMEM_LIMIT),
        )(x, w1c, gammac, betac, w2c, b2c)
        return out_t.T                                   # (B, O)

    # ---------------- two-pass path (large B) ---------------------------------
    TB = min(_round_up(max_tile, 128), _round_up(B, 128))   # lane-dense tiles
    nt = pl.cdiv(B, TB)                                     # real batch tiles
    tiles_per_core = pl.cdiv(nt, 2)                         # 2-way core split
    last = nt - 1

    def x_map_split(c, i):
        # Clamp so the (possible) extra step on core 1 re-reads an in-bounds
        # tile; its contribution is skipped inside the kernel (gt > nt-1).
        return (jnp.minimum(c * tiles_per_core + i, last), 0)

    stats_kernel = functools.partial(
        _bn_stats_kernel, batch=B, tb=TB, nt=nt, tiles_per_core=tiles_per_core)

    sum_hw, sumsq_hw = pl.pallas_call(
        stats_kernel,
        out_shape=(jax.ShapeDtypeStruct((2, H, 1), jnp.float32),
                   jax.ShapeDtypeStruct((2, H, 1), jnp.float32)),
        grid=(2, tiles_per_core),
        in_specs=[
            pl.BlockSpec((TB, F), x_map_split),              # x tile (untransposed)
            pl.BlockSpec((H, F), lambda c, i: (0, 0)),       # W1
        ],
        out_specs=(pl.BlockSpec((1, H, 1), lambda c, i: (c, 0, 0)),
                   pl.BlockSpec((1, H, 1), lambda c, i: (c, 0, 0))),
        compiler_params=pltpu.CompilerParams(
            dimension_semantics=("parallel", "arbitrary"),   # 2 TCs on v7x
            vmem_limit_bytes=_VMEM_LIMIT),
    )(x, w1c)

    # Tiny glue: combine per-core partials, fold BN into one scale/shift.
    # NOTE: E[h^2] - E[h]^2 in f32 can cancel for |mean| >> std; acceptable here.
    s = jnp.sum(sum_hw, axis=0)                              # (H, 1)
    ss = jnp.sum(sumsq_hw, axis=0)                           # (H, 1)
    mean = s / B
    var = jnp.maximum(ss / B - mean * mean, 0.0)             # biased variance
    scale = gammac * jax.lax.rsqrt(var + BN_EPS)             # (H, 1)
    shift = betac - mean * scale                             # b1 cancels

    out_t = pl.pallas_call(
        _apply_kernel,
        out_shape=jax.ShapeDtypeStruct((O, B), jnp.float32),
        grid=(nt,),
        in_specs=[
            pl.BlockSpec((TB, F), lambda i: (i, 0)),   # x tile
            pl.BlockSpec((H, F), lambda i: (0, 0)),    # W1
            pl.BlockSpec((H, 1), lambda i: (0, 0)),    # scale
            pl.BlockSpec((H, 1), lambda i: (0, 0)),    # shift
            pl.BlockSpec((H, 1), lambda i: (0, 0)),    # W2 column
            pl.BlockSpec((1, 1), lambda i: (0, 0)),    # b2
        ],
        out_specs=pl.BlockSpec((O, TB), lambda i: (0, i)),   # lane-dense store
        compiler_params=pltpu.CompilerParams(
            dimension_semantics=("parallel",),
            vmem_limit_bytes=_VMEM_LIMIT),
    )(x, w1c, scale, shift, w2c, b2c)

    return out_t.T                                           # (B, O)


def init_params(key):
    """Deterministic parameter init (PyTorch-style uniform bounds), torch-native shapes."""
    k1, k2, k3, k4 = jax.random.split(key, 4)
    bound1 = 1.0 / jnp.sqrt(NUM_FEATURES)
    bound2 = 1.0 / jnp.sqrt(HIDDEN_DIM)
    w1 = jax.random.uniform(k1, (HIDDEN_DIM, NUM_FEATURES), jnp.float32, -bound1, bound1)
    b1 = jax.random.uniform(k2, (HIDDEN_DIM,), jnp.float32, -bound1, bound1)
    gamma = jnp.ones((HIDDEN_DIM,), jnp.float32)    # BatchNorm1d weight
    beta = jnp.zeros((HIDDEN_DIM,), jnp.float32)    # BatchNorm1d bias
    w2 = jax.random.uniform(k3, (OUTPUT_DIM, HIDDEN_DIM), jnp.float32, -bound2, bound2)
    b2 = jax.random.uniform(k4, (OUTPUT_DIM,), jnp.float32, -bound2, bound2)
    return w1, b1, gamma, beta, w2, b2


def reference_forward(x, w1, b1, gamma, beta, w2, b2):
    """Pure-JAX reference (training-mode BatchNorm batch statistics)."""
    h = x @ w1.T + b1
    mean = jnp.mean(h, axis=0, keepdims=True)
    var = jnp.mean((h - mean) ** 2, axis=0, keepdims=True)
    hn = (h - mean) * jax.lax.rsqrt(var + BN_EPS) * gamma + beta
    r = jnp.maximum(hn, 0.0)
    z = r @ w2.T + b2
    return 1.0 / (1.0 + jnp.exp(-z))


if __name__ == "__main__":
    key = jax.random.PRNGKey(0)
    kx, kp = jax.random.split(key)
    params = init_params(kp)

    # Small batch -> single fused pallas_call path.
    B = 8
    x = jax.random.normal(kx, (B, NUM_FEATURES), jnp.float32)
    out = jax.block_until_ready(network_forward(x, *params))
    ref = reference_forward(x, *params)
    assert out.shape == (B, OUTPUT_DIM)
    assert jnp.allclose(out, ref, atol=2e-5, rtol=2e-5), "mismatch (fused path)"

    # Force the tiled two-pass path at small shapes: odd tile count exercises the
    # 2-core split (clamped duplicate tile) and the masked partial last tile.
    B2 = 1100
    x2 = jax.random.normal(jax.random.PRNGKey(1), (B2, NUM_FEATURES), jnp.float32)
    out2 = jax.block_until_ready(
        network_forward(x2, *params, max_tile=256, fused_max_batch=0))
    ref2 = reference_forward(x2, *params)
    assert out2.shape == (B2, OUTPUT_DIM)
    assert jnp.allclose(out2, ref2, atol=2e-5, rtol=2e-5), "mismatch (tiled path)"

    print("KERNEL_OK")
</pallas_src>

<mosaic_0001>
module attributes {stable_mosaic.version = 11 : i64} {
  func.func @_fused_kernel(%arg0: i32, %arg1: memref<8x16xf32, #tpu.memory_space<vmem>>, %arg2: memref<15x16xf32, #tpu.memory_space<vmem>>, %arg3: memref<15x1xf32, #tpu.memory_space<vmem>>, %arg4: memref<15x1xf32, #tpu.memory_space<vmem>>, %arg5: memref<15x1xf32, #tpu.memory_space<vmem>>, %arg6: memref<1x1xf32, #tpu.memory_space<vmem>>, %arg7: memref<1x8xf32, #tpu.memory_space<vmem>>) attributes {dimension_semantics = [#tpu.dimension_semantics<arbitrary>], iteration_bounds = array<i64: 1>, scalar_prefetch = 0 : i64, scratch_operands = 0 : i64, tpu.core_type = #tpu.core_type<tc>, window_params = [{pipeline_mode = #tpu.pipeline_mode<synchronous>, transform_indices = @transform_0, window_bounds = array<i64: 8, 16>}, {pipeline_mode = #tpu.pipeline_mode<synchronous>, transform_indices = @transform_1, window_bounds = array<i64: 15, 16>}, {pipeline_mode = #tpu.pipeline_mode<synchronous>, transform_indices = @transform_2, window_bounds = array<i64: 15, 1>}, {pipeline_mode = #tpu.pipeline_mode<synchronous>, transform_indices = @transform_3, window_bounds = array<i64: 15, 1>}, {pipeline_mode = #tpu.pipeline_mode<synchronous>, transform_indices = @transform_4, window_bounds = array<i64: 15, 1>}, {pipeline_mode = #tpu.pipeline_mode<synchronous>, transform_indices = @transform_5, window_bounds = array<i64: 1, 1>}, {pipeline_mode = #tpu.pipeline_mode<synchronous>, transform_indices = @transform_6, window_bounds = array<i64: 1, 8>}]} {
    %c0 = arith.constant 0 : index
    %c0_0 = arith.constant 0 : index
    %0 = vector.load %arg2[%c0, %c0_0] : memref<15x16xf32, #tpu.memory_space<vmem>>, vector<15x16xf32>
    %c0_1 = arith.constant 0 : index
    %c0_2 = arith.constant 0 : index
    %1 = vector.load %arg1[%c0_1, %c0_2] : memref<8x16xf32, #tpu.memory_space<vmem>>, vector<8x16xf32>
    %cst = arith.constant dense<0.000000e+00> : vector<15x8xf32>
    %2 = tpu.matmul %0, %1, %cst {dimension_numbers = #tpu.dot_dimension_numbers<[1], [1], [0], [0], [0, 0, 1, 0], [], []>} : vector<15x16xf32>, vector<8x16xf32>, vector<15x8xf32> -> vector<15x8xf32>
    %cst_3 = arith.constant dense<0.000000e+00> : vector<15xf32>
    %3 = vector.multi_reduction <add>, %2, %cst_3 [1] : vector<15x8xf32> to vector<15xf32>
    %4 = vector.shape_cast %3 : vector<15xf32> to vector<15x1xf32>
    %cst_4 = arith.constant 8.000000e+00 : f32
    %5 = vector.broadcast %cst_4 : f32 to vector<15x1xf32>
    %6 = arith.divf %4, %5 : vector<15x1xf32>
    %7 = vector.broadcast %6 : vector<15x1xf32> to vector<15x8xf32>
    %8 = arith.subf %2, %7 : vector<15x8xf32>
    %9 = arith.mulf %8, %8 : vector<15x8xf32>
    %cst_5 = arith.constant dense<0.000000e+00> : vector<15xf32>
    %10 = vector.multi_reduction <add>, %9, %cst_5 [1] : vector<15x8xf32> to vector<15xf32>
    %11 = vector.shape_cast %10 : vector<15xf32> to vector<15x1xf32>
    %cst_6 = arith.constant 8.000000e+00 : f32
    %12 = vector.broadcast %cst_6 : f32 to vector<15x1xf32>
    %13 = arith.divf %11, %12 : vector<15x1xf32>
    %c0_7 = arith.constant 0 : index
    %c0_8 = arith.constant 0 : index
    %14 = vector.load %arg3[%c0_7, %c0_8] : memref<15x1xf32, #tpu.memory_space<vmem>>, vector<15x1xf32>
    %cst_9 = arith.constant 9.99999974E-6 : f32
    %15 = vector.broadcast %cst_9 : f32 to vector<15x1xf32>
    %16 = arith.addf %13, %15 : vector<15x1xf32>
    %17 = math.rsqrt %16 : vector<15x1xf32>
    %18 = arith.mulf %14, %17 : vector<15x1xf32>
    %c0_10 = arith.constant 0 : index
    %c0_11 = arith.constant 0 : index
    %19 = vector.load %arg4[%c0_10, %c0_11] : memref<15x1xf32, #tpu.memory_space<vmem>>, vector<15x1xf32>
    %20 = arith.mulf %6, %18 : vector<15x1xf32>
    %21 = arith.subf %19, %20 : vector<15x1xf32>
    %22 = vector.broadcast %18 : vector<15x1xf32> to vector<15x8xf32>
    %23 = arith.mulf %2, %22 : vector<15x8xf32>
    %24 = vector.broadcast %21 : vector<15x1xf32> to vector<15x8xf32>
    %25 = arith.addf %23, %24 : vector<15x8xf32>
    %cst_12 = arith.constant 0.000000e+00 : f32
    %26 = vector.broadcast %cst_12 : f32 to vector<15x8xf32>
    %27 = arith.maximumf %25, %26 : vector<15x8xf32>
    %c0_13 = arith.constant 0 : index
    %c0_14 = arith.constant 0 : index
    %28 = vector.load %arg5[%c0_13, %c0_14] : memref<15x1xf32, #tpu.memory_space<vmem>>, vector<15x1xf32>
    %29 = vector.broadcast %28 : vector<15x1xf32> to vector<15x8xf32>
    %30 = arith.mulf %27, %29 : vector<15x8xf32>
    %cst_15 = arith.constant dense<0.000000e+00> : vector<8xf32>
    %31 = vector.multi_reduction <add>, %30, %cst_15 [0] : vector<15x8xf32> to vector<8xf32>
    %32 = vector.shape_cast %31 : vector<8xf32> to vector<1x8xf32>
    %c0_16 = arith.constant 0 : index
    %c0_17 = arith.constant 0 : index
    %33 = vector.load %arg6[%c0_16, %c0_17] : memref<1x1xf32, #tpu.memory_space<vmem>>, vector<1x1xf32>
    %34 = vector.broadcast %33 : vector<1x1xf32> to vector<1x8xf32>
    %35 = arith.addf %32, %34 : vector<1x8xf32>
    %cst_18 = arith.constant 0.000000e+00 : f32
    %36 = vector.broadcast %cst_18 : f32 to vector<1x8xf32>
    %37 = arith.subf %36, %35 : vector<1x8xf32>
    %38 = math.exp %37 : vector<1x8xf32>
    %cst_19 = arith.constant 1.000000e+00 : f32
    %39 = vector.broadcast %cst_19 : f32 to vector<1x8xf32>
    %40 = arith.addf %39, %38 : vector<1x8xf32>
    %cst_20 = arith.constant 1.000000e+00 : f32
    %41 = vector.broadcast %cst_20 : f32 to vector<1x8xf32>
    %42 = arith.divf %41, %40 : vector<1x8xf32>
    %c0_21 = arith.constant 0 : index
    %c0_22 = arith.constant 0 : index
    %43 = vector.load %arg7[%c0_21, %c0_22] : memref<1x8xf32, #tpu.memory_space<vmem>>, vector<1x8xf32>
    tpu.vector_store %arg7[%c0_21, %c0_22], %42 {strides = array<i32>} : memref<1x8xf32, #tpu.memory_space<vmem>>, vector<1x8xf32>,
    return
  }
  func.func @transform_0(%arg0: i32) -> (i32, i32) {
    %c0_i32 = arith.constant 0 : i32
    %c0_i32_0 = arith.constant 0 : i32
    %c0_i32_1 = arith.constant 0 : i32
    return %c0_i32, %c0_i32_0 : i32, i32
  }
  func.func @transform_1(%arg0: i32) -> (i32, i32) {
    %c0_i32 = arith.constant 0 : i32
    %c0_i32_0 = arith.constant 0 : i32
    %c0_i32_1 = arith.constant 0 : i32
    return %c0_i32, %c0_i32_0 : i32, i32
  }
  func.func @transform_2(%arg0: i32) -> (i32, i32) {
    %c0_i32 = arith.constant 0 : i32
    %c0_i32_0 = arith.constant 0 : i32
    %c0_i32_1 = arith.constant 0 : i32
    return %c0_i32, %c0_i32_0 : i32, i32
  }
  func.func @transform_3(%arg0: i32) -> (i32, i32) {
    %c0_i32 = arith.constant 0 : i32
    %c0_i32_0 = arith.constant 0 : i32
    %c0_i32_1 = arith.constant 0 : i32
    return %c0_i32, %c0_i32_0 : i32, i32
  }
  func.func @transform_4(%arg0: i32) -> (i32, i32) {
    %c0_i32 = arith.constant 0 : i32
    %c0_i32_0 = arith.constant 0 : i32
    %c0_i32_1 = arith.constant 0 : i32
    return %c0_i32, %c0_i32_0 : i32, i32
  }
  func.func @transform_5(%arg0: i32) -> (i32, i32) {
    %c0_i32 = arith.constant 0 : i32
    %c0_i32_0 = arith.constant 0 : i32
    %c0_i32_1 = arith.constant 0 : i32
    return %c0_i32, %c0_i32_0 : i32, i32
  }
  func.func @transform_6(%arg0: i32) -> (i32, i32) {
    %c0_i32 = arith.constant 0 : i32
    %c0_i32_0 = arith.constant 0 : i32
    %c0_i32_1 = arith.constant 0 : i32
    return %c0_i32, %c0_i32_0 : i32, i32
  }
}

</mosaic_0001>

<llo_original>
// kernel: tpu_custom_call.1
$region0: #{tpu_custom_call.1}
  #allocation0 [shape = 'u32[]', space=smem, size = 0x4, offset = 0x4, fixed_abs, tag = 'smem constant byte address 0x4 - core index']
  #allocation1 [shape = 'u32[144,128]{1,0:T(1,128)}', space=vmem, size = 0x12000, scoped, tag = 'internal scratch']
  #allocation2 [shape = 'f32[1,1]{1,0:T(1,128)S(1)}', space=vmem, size = 0x200, scoped, tag = 'scoped memory for tpu_custom_call.1']
  %s0 = inlined_call_operand.vmem [shape: f32[8,16], index: 0, kind: input, shape index: {}]
  %s1 = inlined_call_operand.vmem [shape: f32[15,16], index: 1, kind: input, shape index: {}]
  %s2 = inlined_call_operand.vmem [shape: f32[15,1], index: 2, kind: input, shape index: {}]
  %s3 = inlined_call_operand.vmem [shape: f32[15,1], index: 3, kind: input, shape index: {}]
  %s4 = inlined_call_operand.vmem [shape: f32[15,1], index: 4, kind: input, shape index: {}]
  %s5 = inlined_call_operand.<no memory space> [shape: f32[1,1], index: 5, kind: input, shape index: {}]
  %s6 = inlined_call_operand.hbm [shape: f32[1,8], index: 6, kind: output, shape index: {}]
  %s7 = sld [smem:[#allocation0]]
  $region34: #{tpu_custom_call.1} parent=0
    _
  %s9 = ssub.s32 1, %s7
  %s10 = scalar_select 0, %s9, %s7
  %v11 = vstv %s5
  %12 = vst [vmem:[#allocation2] sm:$0x1] %v11
  $region1: #{tpu_custom_call.1} parent=0
    #allocation3 [shape = 'u8[512]{0}', space=vmem, size = 0x400, scoped, tag = 'output window, operand 0, single buffered']
    #allocation4 [shape = 's32[1]{0}', space=sflag, size = 0x4, scoped, tag = 'scoped memory for tpu_custom_call.1']
    %13 = vsyncpa [#allocation4], 0
    // Predicated region
    $region2: #{tpu_custom_call.1} parent=1 // pred_check
      _
    $region3: #{tpu_custom_call.1} parent=1 // pred_check_branch
      %15 = sbr.rel (0) target = $region5
    $region4: #{tpu_custom_call.1} parent=1 // pred_region
      _
    $region5: #{tpu_custom_call.1} parent=1 // pred_fallthru
      _
    // Predicated region
    $region6: #{tpu_custom_call.1} parent=1 // pred_check
      _
    $region7: #{tpu_custom_call.1} parent=1 // pred_check_branch
      %17 = sbr.rel (0) target = $region9
    $region8: #{tpu_custom_call.1} parent=1 // pred_region
      _
    $region9: #{tpu_custom_call.1} parent=1 // pred_fallthru
      _
    // Predicated region
    $region10: #{tpu_custom_call.1} parent=1 // pred_check
      _
    $region11: #{tpu_custom_call.1} parent=1 // pred_check_branch
      %19 = sbr.rel (0) target = $region13
    $region12: #{tpu_custom_call.1} parent=1 // pred_region
      _
    $region13: #{tpu_custom_call.1} parent=1 // pred_fallthru
      _
    // Predicated region
    $region14: #{tpu_custom_call.1} parent=1 // pred_check
      _
    $region15: #{tpu_custom_call.1} parent=1 // pred_check_branch
      %21 = sbr.rel (0) target = $region17
    $region16: #{tpu_custom_call.1} parent=1 // pred_region
      _
    $region17: #{tpu_custom_call.1} parent=1 // pred_fallthru
      _
    // Predicated region
    $region18: #{tpu_custom_call.1} parent=1 // pred_check
      _
    $region19: #{tpu_custom_call.1} parent=1 // pred_check_branch
      %23 = sbr.rel (0) target = $region21
    $region20: #{tpu_custom_call.1} parent=1 // pred_region
      _
    $region21: #{tpu_custom_call.1} parent=1 // pred_fallthru
      _
    // Predicated region
    $region22: #{tpu_custom_call.1} parent=1 // pred_check
      _
    $region23: #{tpu_custom_call.1} parent=1 // pred_check_branch
      %25 = sbr.rel (0) target = $region25
    $region24: #{tpu_custom_call.1} parent=1 // pred_region
      _
    $region25: #{tpu_custom_call.1} parent=1 // pred_fallthru
      _
    %v26 = vld [vmem:[%s1] sm:$0xff]
    %v27 = vld [vmem:[%s1 + $0x8] sm:$0x7f]
    %v28 = vld [vmem:[%s0] sm:$0xff]
    %vm29 = vcmask 130048
    %v31 = vsel %vm29, %v26, 0
    %v34 = vsel %vm29, %v27, 0
    %v37 = vsel %vm29, %v28, 0
    %39 = vmatprep.subr.mxu0 0.0
    %40 = vmatpush1.xpose.msra.mxu0 %v37
    %41 = vmatprep.subr.mxu0 0.0
    %42 = vmatpush1.xpose.msra.mxu0 0.0
    %43 = vmatprep.subr.mxu0 0.0
    %44 = vmatpush1.xpose.msra.mxu0 0.0
    %45 = vmatprep.subr.mxu0 0.0
    %46 = vmatpush1.xpose.msra.mxu0 0.0
    %47 = vmatprep.subr.mxu0 0.0
    %48 = vmatpush1.xpose.msra.mxu0 0.0
    %49 = vmatprep.subr.mxu0 0.0
    %50 = vmatpush1.xpose.msra.mxu0 0.0
    %51 = vmatprep.subr.mxu0 0.0
    %52 = vmatpush1.xpose.msra.mxu0 0.0
    %53 = vmatprep.subr.mxu0 0.0
    %54 = vmatpush1.xpose.msra.mxu0 0.0
    %55 = vmatprep.subr.mxu0 0.0
    %56 = vmatpush1.xpose.msra.mxu0 0.0
    %57 = vmatprep.subr.mxu0 0.0
    %58 = vmatpush1.xpose.msra.mxu0 0.0
    %59 = vmatprep.subr.mxu0 0.0
    %60 = vmatpush1.xpose.msra.mxu0 0.0
    %61 = vmatprep.subr.mxu0 0.0
    %62 = vmatpush1.xpose.msra.mxu0 0.0
    %63 = vmatprep.subr.mxu0 0.0
    %64 = vmatpush1.xpose.msra.mxu0 0.0
    %65 = vmatprep.subr.mxu0 0.0
    %66 = vmatpush1.xpose.msra.mxu0 0.0
    %67 = vmatprep.subr.mxu0 0.0
    %68 = vmatpush1.xpose.msra.mxu0 0.0
    %69 = vmatprep.subr.mxu0 0.0
    %70 = vmatpush1.xpose.msra.mxu0 0.0
    %71 = vmatprep.subr.mxu0 0.0
    %72 = vmatpush1.xpose.msra.mxu0 0.0
    %73 = vmatprep.subr.mxu0 0.0
    %74 = vmatpush1.xpose.msra.mxu0 0.0
    %75 = vmatprep.subr.mxu0 0.0
    %76 = vmatpush1.xpose.msra.mxu0 0.0
    %77 = vmatprep.subr.mxu0 0.0
    %78 = vmatpush1.xpose.msra.mxu0 0.0
    %79 = vmatprep.subr.mxu0 0.0
    %80 = vmatpush1.xpose.msra.mxu0 0.0
    %81 = vmatprep.subr.mxu0 0.0
    %82 = vmatpush1.xpose.msra.mxu0 0.0
    %83 = vmatprep.subr.mxu0 0.0
    %84 = vmatpush1.xpose.msra.mxu0 0.0
    %85 = vmatprep.subr.mxu0 0.0
    %86 = vmatpush1.xpose.msra.mxu0 0.0
    %87 = vmatprep.subr.mxu0 0.0
    %88 = vmatpush1.xpose.msra.mxu0 0.0
    %89 = vmatprep.subr.mxu0 0.0
    %90 = vmatpush1.xpose.msra.mxu0 0.0
    %91 = vmatprep.subr.mxu0 0.0
    %92 = vmatpush1.xpose.msra.mxu0 0.0
    %93 = vmatprep.subr.mxu0 0.0
    %94 = vmatpush1.xpose.msra.mxu0 0.0
    %95 = vmatprep.subr.mxu0 0.0
    %96 = vmatpush1.xpose.msra.mxu0 0.0
    %97 = vmatprep.subr.mxu0 0.0
    %98 = vmatpush1.xpose.msra.mxu0 0.0
    %99 = vmatprep.subr.mxu0 0.0
    %100 = vmatpush1.xpose.msra.mxu0 0.0
    %101 = vmatprep.subr.mxu0 0.0
    %102 = vmatpush1.xpose.msra.mxu0 0.0
    %103 = vmatprep.mubr.f32.mxu0 0.0
    %104 = vmatmul.mubr.f32.gmra.mrb[0].mxu0 %v31
    %v105 = vpop.f32.mrb[0].mxu0
    %v106 = vadd.f32 0.0, %v105
    %v107 = vpop.f32.mrb[0].mxu0
    %108 = vmatprep.mubr.f32.mxu0 0.0
    %109 = vmatmul.mubr.f32.gmra.mrb[0].mxu0 %v34
    %v110 = vpop.f32.mrb[0].mxu0
    %v111 = vadd.f32 0.0, %v110
    %v112 = vpop.f32.mrb[0].mxu0
    %113 = vdwg.mxu0
    %vm114 = vcmask 64512
    %v115 = vsel %vm114, %v106, 0.0
    %116 = vadd.xlane.f32.xlu0 %v115
    %v117 = vpop.xlane.xlu0 %116
    %vm118 = vcmask 63488
    %v119 = vsel %vm118, %v111, 0.0
    %120 = vadd.xlane.f32.xlu0 %v119
    %v121 = vpop.xlane.xlu0 %120
    %v122 = vrcp.pop 8.0
    %v123 = vmul.f32 %v117, %v122
    %v124 = vmul.f32 %v121, %v122
    %v125 = vsub.f32 %v106, %v123
    %v126 = vsub.f32 %v111, %v124
    %v127 = vmul.f32 %v125, %v125
    %v128 = vmul.f32 %v126, %v126
    %v129 = vsel %vm114, %v127, 0.0
    %130 = vadd.xlane.f32.xlu0 %v129
    %v131 = vpop.xlane.xlu0 %130
    %v132 = vsel %vm118, %v128, 0.0
    %133 = vadd.xlane.f32.xlu0 %v132
    %v134 = vpop.xlane.xlu0 %133
    %v135 = vmul.f32 %v131, %v122
    %v136 = vmul.f32 %v134, %v122
    %v137 = vld [vmem:[%s2] sm:$0xff]
    %v138 = vld [vmem:[%s2 + $0x8] sm:$0x7f]
    %v139 = vadd.f32 %v135, 1e-05
    %v140 = vadd.f32 %v136, 1e-05
    %v141 = vrsqrt.pop %v139
    %v142 = vrsqrt.pop %v140
    %v143 = vmul.f32 %v137, %v141
    %v144 = vmul.f32 %v138, %v142
    %v145 = vld [vmem:[%s3] sm:$0xff]
    %v146 = vld [vmem:[%s3 + $0x8] sm:$0x7f]
    %v147 = vmul.f32 %v123, %v143
    %v148 = vmul.f32 %v124, %v144
    %v149 = vsub.f32 %v145, %v147
    %v150 = vsub.f32 %v146, %v148
    %152 = vset.pattern.permute.xlu0 0
    %153 = vperm.xlu0 %152, %v143
    %v154 = vpop.permute.xlu0 %153
    %157 = vset.pattern.permute.xlu0 0
    %158 = vperm.xlu0 %157, %v144
    %v159 = vpop.permute.xlu0 %158
    %v161 = vmul.f32 %v106, %v154
    %v162 = vmul.f32 %v111, %v159
    %164 = vset.pattern.permute.xlu0 0
    %165 = vperm.xlu0 %164, %v149
    %v166 = vpop.permute.xlu0 %165
    %169 = vset.pattern.permute.xlu0 0
    %170 = vperm.xlu0 %169, %v150
    %v171 = vpop.permute.xlu0 %170
    %v173 = vadd.f32 %v161, %v166
    %v174 = vadd.f32 %v162, %v171
    %v175 = vmax.f32 %v173, 0.0
    %v176 = vmax.f32 %v174, 0.0
    %v177 = vld [vmem:[%s4] sm:$0xff]
    %v178 = vld [vmem:[%s4 + $0x8] sm:$0x7f]
    %180 = vset.pattern.permute.xlu0 0
    %181 = vperm.xlu0 %180, %v177
    %v182 = vpop.permute.xlu0 %181
    %185 = vset.pattern.permute.xlu0 0
    %186 = vperm.xlu0 %185, %v178
    %v187 = vpop.permute.xlu0 %186
    %v189 = vmul.f32 %v175, %v182
    %v190 = vmul.f32 %v176, %v187
    %v191 = vsel %vm114, %v189, 0.0
    %v192 = vsel %vm118, %v190, 0.0
    %v193 = vadd.f32 %v191, %v192
    %v194 = vrot.slane %v193, 4
    %v195 = vadd.f32 %v193, %v194
    %v196 = vrot.slane %v195, 2
    %v197 = vadd.f32 %v195, %v196
    %v198 = vrot.slane %v197, 1
    %v199 = vadd.f32 %v197, %v198
    %v200 = vld [vmem:[#allocation2] sm:$0x1]
    %202 = vset.pattern.permute.xlu0 0
    %203 = vperm.xlu0 %202, %v200
    %v204 = vpop.permute.xlu0 %203
    %v206 = vlaneseq
    %v207 = vshrl.u32 %v206, 7
    %v208 = vsub.s32 0, %v207
    %v209 = vrot.slane %v204, %v208
    %v210 = vadd.f32 %v199, %v209
    %v211 = vsub.f32 0.0, %v210
    %v212 = vmul.f32 %v211, 1.442695
    %v213 = vpow.pop %v212
    %v214 = vadd.f32 %v213, 1.0
    %v215 = vrcp.pop %v214
    %v216 = vmul.f32 1.0, %v215
    %vm217 = vcmask 57344
    %218 = vst.msk [vmem:[#allocation3] sm:$0x1] %vm217, %v216
    // Predicated region
    $region26: #{tpu_custom_call.1} parent=1 // pred_check
      _
    $region27: #{tpu_custom_call.1} parent=1 // pred_check_branch
      %220 = sbr.rel (0) target = $region29
    $region28: #{tpu_custom_call.1} parent=1 // pred_region
      %s222 = ssub.s32 16, 16
      %223 = vsyncadd [#allocation4], %s222
      %s225 = sshll.u32 [#allocation3], 4
      %s226 = int_to_ptr.vmem [resolvable:$true] %s225
      %228 = dma.vmem_to_hbm [thread:$0]  %s226, 16, %s6, [#allocation4]
    $region29: #{tpu_custom_call.1} parent=1 // pred_fallthru
      _
    // Predicated region
    $region30: #{tpu_custom_call.1} parent=1 // pred_check
      _
    $region31: #{tpu_custom_call.1} parent=1 // pred_check_branch
      %230 = sbr.rel (0) target = $region33
    $region32: #{tpu_custom_call.1} parent=1 // pred_region
      %231 = dma.done [#allocation4], 16
    $region33: #{tpu_custom_call.1} parent=1 // pred_fallthru
      _
    %232 = vsyncpa [#allocation4], 1

</llo_original>
